<compile_context>
chip_gen: v7x
topology: tpu7x:2x2x1
jax: 0.10.0
libtpu: 0.0.40
codegen_flags: <defaults>
</compile_context>

<pallas_src>
import functools

import jax
import jax.numpy as jnp
import numpy as np
from jax import lax
from jax.experimental import pallas as pl
from jax.experimental.pallas import tpu as pltpu


def _round_up(x, m):
    return (x + m - 1) // m * m


def _make_kernel(obs_dim, act_dim, buf_size, in_dim, k_pad):
    """Builds the fused kernel for a fixed feature layout."""

    def kernel(*refs):
        obs_ref = refs[0]
        act_buf_refs = refs[1:1 + buf_size]
        (obs_del_ref, act_del_ref, act_ref,
         w_ref, b_ref, out_ref, x_ref) = refs[1 + buf_size:]
        tb = out_ref.shape[0]

        # ---- assemble the padded input tile in VMEM (cheap VPU/vst work,
        #      hidden under the matmul / DMA) ------------------------------
        x_ref[:, 0:obs_dim] = obs_ref[...]
        col = obs_dim
        for r in act_buf_refs:                       # action buffer pieces
            x_ref[:, col:col + act_dim] = r[...]
            col += act_dim

        # one_hot(delay) == torch.zeros(...).scatter_(1, delay, 1.0)
        lane = lax.broadcasted_iota(jnp.int32, (tb, buf_size), 1)
        x_ref[:, col:col + buf_size] = (
            lane == obs_del_ref[...]).astype(x_ref.dtype)
        col += buf_size
        x_ref[:, col:col + buf_size] = (
            lane == act_del_ref[...]).astype(x_ref.dtype)
        col += buf_size
        x_ref[:, col:col + act_dim] = act_ref[...]
        col += act_dim

        # keep the padding lanes finite (matching zero weight rows)
        if k_pad > in_dim:
            x_ref[:, in_dim:k_pad] = jnp.zeros((tb, k_pad - in_dim),
                                               x_ref.dtype)

        # ---- one fused MXU matmul over the whole (padded) feature axis ----
        out_ref[...] = (
            jnp.dot(x_ref[...], w_ref[...], preferred_element_type=jnp.float32)
            + b_ref[...]
        ).astype(out_ref.dtype)

    return kernel


def prepare_params(weight, bias):
    """One-time parameter prep (parameter-init time, NOT the per-step path).

    weight: (hidden_units, in_features)  -- PyTorch Linear layout
    bias:   (hidden_units,)

    Returns the transposed weight zero-padded to (K_pad, H_pad) and the bias
    zero-padded to (1, H_pad), both multiples of 128 -> lane-dense tiles.
    """
    h, in_f = weight.shape
    k_pad = _round_up(in_f, 128)
    h_pad = _round_up(h, 128)
    w_pad = jnp.zeros((k_pad, h_pad), jnp.float32)
    w_pad = w_pad.at[:in_f, :h].set(weight.T.astype(jnp.float32))
    b_pad = jnp.zeros((1, h_pad), jnp.float32)
    b_pad = b_pad.at[0, :h].set(bias.astype(jnp.float32))
    return w_pad, b_pad


@functools.partial(
    jax.jit, static_argnames=("obs_dim", "act_dim", "buf_size", "hidden_units"))
def delayed_mlp_forward(obs, act_buf, obs_del, act_del, act, w_pad, b_pad,
                        *, obs_dim, act_dim, buf_size, hidden_units):
    """Fused DelayedMlpModule forward. act_buf is a tuple/list of (B, act_dim)."""
    B = obs.shape[0]
    in_dim = obs_dim + (act_dim + 2) * buf_size + act_dim
    k_pad, h_pad = w_pad.shape
    assert k_pad == _round_up(in_dim, 128)
    assert h_pad >= hidden_units

    # tile sizes: batch rows a multiple of 8 (capped at 128 per grid step),
    # output lanes a multiple of 128 (portable across v5e/v6e/v7x MXU widths).
    tb = min(128, _round_up(B, 8))
    b_rows = _round_up(B, tb)
    tn = min(128, h_pad)

    def pad_rows(x):
        p = b_rows - x.shape[0]
        return jnp.pad(x, ((0, p), (0, 0))) if p else x

    obs_p = pad_rows(obs.astype(jnp.float32))
    act_buf_p = [pad_rows(a.astype(jnp.float32)) for a in act_buf]
    act_p = pad_rows(act.astype(jnp.float32))
    obs_del_p = pad_rows(obs_del.reshape(B, 1).astype(jnp.int32))
    act_del_p = pad_rows(act_del.reshape(B, 1).astype(jnp.int32))

    grid = (b_rows // tb, h_pad // tn)

    def row_spec(d):
        return pl.BlockSpec((tb, d), lambda i, j: (i, 0))

    in_specs = (
        [row_spec(obs_dim)]
        + [row_spec(act_dim)] * buf_size
        + [row_spec(1), row_spec(1), row_spec(act_dim)]
        + [pl.BlockSpec((k_pad, tn), lambda i, j: (0, j)),
           pl.BlockSpec((1, tn), lambda i, j: (0, j))]
    )

    kernel = _make_kernel(obs_dim, act_dim, buf_size, in_dim, k_pad)

    cost = pl.CostEstimate(
        flops=2 * b_rows * k_pad * h_pad,
        transcendentals=0,
        bytes_accessed=4 * (b_rows * (in_dim + h_pad) + k_pad * h_pad + h_pad),
    )

    out = pl.pallas_call(
        kernel,
        out_shape=jax.ShapeDtypeStruct((b_rows, h_pad), jnp.float32),
        grid_spec=pltpu.PrefetchScalarGridSpec(
            num_scalar_prefetch=0,
            grid=grid,
            in_specs=in_specs,
            out_specs=pl.BlockSpec((tb, tn), lambda i, j: (i, j)),
            scratch_shapes=[pltpu.VMEM((tb, k_pad), jnp.float32)],
        ),
        compiler_params=pltpu.CompilerParams(
            dimension_semantics=("parallel", "parallel")),
        cost_estimate=cost,
    )(obs_p, *act_buf_p, obs_del_p, act_del_p, act_p, w_pad, b_pad)

    # strip batch / hidden padding
    return out[:B, :hidden_units]


def reference_forward(obs, act_buf_list, obs_del, act_del, act, weight, bias,
                      *, buf_size):
    """Pure-JAX reference mirroring the PyTorch forward exactly."""
    act_buf = jnp.concatenate(act_buf_list, axis=1)
    inp = jnp.concatenate([obs, act_buf], axis=1)
    obs_oh = jax.nn.one_hot(obs_del, buf_size, dtype=jnp.float32)
    act_oh = jax.nn.one_hot(act_del, buf_size, dtype=jnp.float32)
    inp = jnp.concatenate([inp, obs_oh, act_oh, act], axis=1)
    return inp @ weight.T + bias


if __name__ == "__main__":
    # Small, module-consistent configuration:
    #   is_Q_network=True, obs_delay=True, act_delay=True, tbmdp=False
    batch = 4
    obs_dim = 6
    act_dim = 3
    buf_size = 4          # obs_delay_range.stop + act_delay_range.stop
    hidden_units = 32
    in_features = obs_dim + (act_dim + 2) * buf_size + act_dim   # 29

    key = jax.random.PRNGKey(0)
    keys = jax.random.split(key, 8 + buf_size)

    # Deterministic parameter init (PyTorch Linear default: U(-1/sqrt(in), 1/sqrt(in)))
    bound = 1.0 / np.sqrt(in_features)
    weight = jax.random.uniform(keys[0], (hidden_units, in_features),
                                jnp.float32, -bound, bound)
    bias = jax.random.uniform(keys[1], (hidden_units,), jnp.float32, -bound, bound)

    # One-time parameter prep (transpose + 128-pad) -- hoisted out of the hot path.
    w_pad, b_pad = prepare_params(weight, bias)

    # Example inputs (the tuple x = (obs, act_buf, obs_del, act_del, ..., act))
    obs = jax.random.normal(keys[2], (batch, obs_dim), jnp.float32)
    act_buf_list = [jax.random.normal(keys[4 + i], (batch, act_dim), jnp.float32)
                    for i in range(buf_size)]
    obs_del = jax.random.randint(keys[3], (batch,), 0, buf_size, jnp.int32)
    act_del = jax.random.randint(keys[4 + buf_size], (batch,), 0, buf_size, jnp.int32)
    act = jax.random.normal(keys[5 + buf_size], (batch, act_dim), jnp.float32)

    out = delayed_mlp_forward(obs, tuple(act_buf_list), obs_del, act_del, act,
                              w_pad, b_pad,
                              obs_dim=obs_dim, act_dim=act_dim,
                              buf_size=buf_size, hidden_units=hidden_units)
    out = jax.block_until_ready(out)

    ref = reference_forward(obs, act_buf_list, obs_del, act_del, act,
                            weight, bias, buf_size=buf_size)
    ref = jax.block_until_ready(ref)

    np.testing.assert_allclose(np.asarray(out), np.asarray(ref),
                               rtol=1e-5, atol=1e-5)
    print("KERNEL_OK")
</pallas_src>

<mosaic_0001>
module attributes {stable_mosaic.version = 11 : i64} {
  func.func @kernel(%arg0: i32, %arg1: i32, %arg2: memref<8x6xf32, #tpu.memory_space<vmem>>, %arg3: memref<8x3xf32, #tpu.memory_space<vmem>>, %arg4: memref<8x3xf32, #tpu.memory_space<vmem>>, %arg5: memref<8x3xf32, #tpu.memory_space<vmem>>, %arg6: memref<8x3xf32, #tpu.memory_space<vmem>>, %arg7: memref<8x1xi32, #tpu.memory_space<vmem>>, %arg8: memref<8x1xi32, #tpu.memory_space<vmem>>, %arg9: memref<8x3xf32, #tpu.memory_space<vmem>>, %arg10: memref<128x128xf32, #tpu.memory_space<vmem>>, %arg11: memref<1x128xf32, #tpu.memory_space<vmem>>, %arg12: memref<8x128xf32, #tpu.memory_space<vmem>>, %arg13: memref<8x128xf32, #tpu.memory_space<vmem>>) attributes {dimension_semantics = [#tpu.dimension_semantics<parallel>, #tpu.dimension_semantics<parallel>], iteration_bounds = array<i64: 1, 1>, scalar_prefetch = 0 : i64, scratch_operands = 1 : i64, tpu.core_type = #tpu.core_type<tc>, window_params = [{transform_indices = @transform_0, window_bounds = array<i64: 8, 6>}, {transform_indices = @transform_1, window_bounds = array<i64: 8, 3>}, {transform_indices = @transform_2, window_bounds = array<i64: 8, 3>}, {transform_indices = @transform_3, window_bounds = array<i64: 8, 3>}, {transform_indices = @transform_4, window_bounds = array<i64: 8, 3>}, {transform_indices = @transform_5, window_bounds = array<i64: 8, 1>}, {transform_indices = @transform_6, window_bounds = array<i64: 8, 1>}, {transform_indices = @transform_7, window_bounds = array<i64: 8, 3>}, {transform_indices = @transform_8, window_bounds = array<i64: 128, 128>}, {transform_indices = @transform_9, window_bounds = array<i64: 1, 128>}, {transform_indices = @transform_10, window_bounds = array<i64: 8, 128>}]} {
    %c0 = arith.constant 0 : index
    %c0_0 = arith.constant 0 : index
    %0 = vector.load %arg2[%c0, %c0_0] : memref<8x6xf32, #tpu.memory_space<vmem>>, vector<8x6xf32>
    %c0_1 = arith.constant 0 : index
    %c0_2 = arith.constant 0 : index
    %1 = vector.load %arg13[%c0_1, %c0_2] : memref<8x128xf32, #tpu.memory_space<vmem>>, vector<8x6xf32>
    tpu.vector_store %arg13[%c0_1, %c0_2], %0 {strides = array<i32>} : memref<8x128xf32, #tpu.memory_space<vmem>>, vector<8x6xf32>,
    %c0_3 = arith.constant 0 : index
    %c0_4 = arith.constant 0 : index
    %2 = vector.load %arg3[%c0_3, %c0_4] : memref<8x3xf32, #tpu.memory_space<vmem>>, vector<8x3xf32>
    %c0_5 = arith.constant 0 : index
    %c6 = arith.constant 6 : index
    %3 = vector.load %arg13[%c0_5, %c6] : memref<8x128xf32, #tpu.memory_space<vmem>>, vector<8x3xf32>
    tpu.vector_store %arg13[%c0_5, %c6], %2 {strides = array<i32>} : memref<8x128xf32, #tpu.memory_space<vmem>>, vector<8x3xf32>,
    %c0_6 = arith.constant 0 : index
    %c0_7 = arith.constant 0 : index
    %4 = vector.load %arg4[%c0_6, %c0_7] : memref<8x3xf32, #tpu.memory_space<vmem>>, vector<8x3xf32>
    %c0_8 = arith.constant 0 : index
    %c9 = arith.constant 9 : index
    %5 = vector.load %arg13[%c0_8, %c9] : memref<8x128xf32, #tpu.memory_space<vmem>>, vector<8x3xf32>
    tpu.vector_store %arg13[%c0_8, %c9], %4 {strides = array<i32>} : memref<8x128xf32, #tpu.memory_space<vmem>>, vector<8x3xf32>,
    %c0_9 = arith.constant 0 : index
    %c0_10 = arith.constant 0 : index
    %6 = vector.load %arg5[%c0_9, %c0_10] : memref<8x3xf32, #tpu.memory_space<vmem>>, vector<8x3xf32>
    %c0_11 = arith.constant 0 : index
    %c12 = arith.constant 12 : index
    %7 = vector.load %arg13[%c0_11, %c12] : memref<8x128xf32, #tpu.memory_space<vmem>>, vector<8x3xf32>
    tpu.vector_store %arg13[%c0_11, %c12], %6 {strides = array<i32>} : memref<8x128xf32, #tpu.memory_space<vmem>>, vector<8x3xf32>,
    %c0_12 = arith.constant 0 : index
    %c0_13 = arith.constant 0 : index
    %8 = vector.load %arg6[%c0_12, %c0_13] : memref<8x3xf32, #tpu.memory_space<vmem>>, vector<8x3xf32>
    %c0_14 = arith.constant 0 : index
    %c15 = arith.constant 15 : index
    %9 = vector.load %arg13[%c0_14, %c15] : memref<8x128xf32, #tpu.memory_space<vmem>>, vector<8x3xf32>
    tpu.vector_store %arg13[%c0_14, %c15], %8 {strides = array<i32>} : memref<8x128xf32, #tpu.memory_space<vmem>>, vector<8x3xf32>,
    %10 = tpu.iota {dimensions = array<i32: 1>} : vector<8x4xi32>
    %c0_15 = arith.constant 0 : index
    %c0_16 = arith.constant 0 : index
    %11 = vector.load %arg7[%c0_15, %c0_16] : memref<8x1xi32, #tpu.memory_space<vmem>>, vector<8x1xi32>
    %12 = vector.broadcast %11 : vector<8x1xi32> to vector<8x4xi32>
    %13 = arith.cmpi eq, %10, %12 : vector<8x4xi32>
    %14 = arith.extui %13 : vector<8x4xi1> to vector<8x4xi32>
    %15 = arith.sitofp %14 : vector<8x4xi32> to vector<8x4xf32>
    %c0_17 = arith.constant 0 : index
    %c18 = arith.constant 18 : index
    %16 = vector.load %arg13[%c0_17, %c18] : memref<8x128xf32, #tpu.memory_space<vmem>>, vector<8x4xf32>
    tpu.vector_store %arg13[%c0_17, %c18], %15 {strides = array<i32>} : memref<8x128xf32, #tpu.memory_space<vmem>>, vector<8x4xf32>,
    %c0_18 = arith.constant 0 : index
    %c0_19 = arith.constant 0 : index
    %17 = vector.load %arg8[%c0_18, %c0_19] : memref<8x1xi32, #tpu.memory_space<vmem>>, vector<8x1xi32>
    %18 = vector.broadcast %17 : vector<8x1xi32> to vector<8x4xi32>
    %19 = arith.cmpi eq, %10, %18 : vector<8x4xi32>
    %20 = arith.extui %19 : vector<8x4xi1> to vector<8x4xi32>
    %21 = arith.sitofp %20 : vector<8x4xi32> to vector<8x4xf32>
    %c0_20 = arith.constant 0 : index
    %c22 = arith.constant 22 : index
    %22 = vector.load %arg13[%c0_20, %c22] : memref<8x128xf32, #tpu.memory_space<vmem>>, vector<8x4xf32>
    tpu.vector_store %arg13[%c0_20, %c22], %21 {strides = array<i32>} : memref<8x128xf32, #tpu.memory_space<vmem>>, vector<8x4xf32>,
    %c0_21 = arith.constant 0 : index
    %c0_22 = arith.constant 0 : index
    %23 = vector.load %arg9[%c0_21, %c0_22] : memref<8x3xf32, #tpu.memory_space<vmem>>, vector<8x3xf32>
    %c0_23 = arith.constant 0 : index
    %c26 = arith.constant 26 : index
    %24 = vector.load %arg13[%c0_23, %c26] : memref<8x128xf32, #tpu.memory_space<vmem>>, vector<8x3xf32>
    tpu.vector_store %arg13[%c0_23, %c26], %23 {strides = array<i32>} : memref<8x128xf32, #tpu.memory_space<vmem>>, vector<8x3xf32>,
    %cst = arith.constant 0.000000e+00 : f32
    %25 = vector.broadcast %cst : f32 to vector<8x99xf32>
    %c0_24 = arith.constant 0 : index
    %c29 = arith.constant 29 : index
    %26 = vector.load %arg13[%c0_24, %c29] : memref<8x128xf32, #tpu.memory_space<vmem>>, vector<8x99xf32>
    tpu.vector_store %arg13[%c0_24, %c29], %25 {strides = array<i32>} : memref<8x128xf32, #tpu.memory_space<vmem>>, vector<8x99xf32>,
    %c0_25 = arith.constant 0 : index
    %c0_26 = arith.constant 0 : index
    %27 = vector.load %arg13[%c0_25, %c0_26] : memref<8x128xf32, #tpu.memory_space<vmem>>, vector<8x128xf32>
    %c0_27 = arith.constant 0 : index
    %c0_28 = arith.constant 0 : index
    %28 = vector.load %arg10[%c0_27, %c0_28] : memref<128x128xf32, #tpu.memory_space<vmem>>, vector<128x128xf32>
    %cst_29 = arith.constant dense<0.000000e+00> : vector<8x128xf32>
    %29 = tpu.matmul %27, %28, %cst_29 {dimension_numbers = #tpu.dot_dimension_numbers<[1], [0], [0], [1], [0, 0, 1, 1], [], []>} : vector<8x128xf32>, vector<128x128xf32>, vector<8x128xf32> -> vector<8x128xf32>
    %c0_30 = arith.constant 0 : index
    %c0_31 = arith.constant 0 : index
    %30 = vector.load %arg11[%c0_30, %c0_31] : memref<1x128xf32, #tpu.memory_space<vmem>>, vector<1x128xf32>
    %31 = vector.broadcast %30 : vector<1x128xf32> to vector<8x128xf32>
    %32 = arith.addf %29, %31 : vector<8x128xf32>
    %c0_32 = arith.constant 0 : index
    %c0_33 = arith.constant 0 : index
    %33 = vector.load %arg12[%c0_32, %c0_33] : memref<8x128xf32, #tpu.memory_space<vmem>>, vector<8x128xf32>
    tpu.vector_store %arg12[%c0_32, %c0_33], %32 {strides = array<i32>} : memref<8x128xf32, #tpu.memory_space<vmem>>, vector<8x128xf32>,
    return
  }
  func.func @transform_0(%arg0: i32, %arg1: i32) -> (i32, i32) {
    %c0_i32 = arith.constant 0 : i32
    %c0_i32_0 = arith.constant 0 : i32
    return %arg0, %c0_i32 : i32, i32
  }
  func.func @transform_1(%arg0: i32, %arg1: i32) -> (i32, i32) {
    %c0_i32 = arith.constant 0 : i32
    %c0_i32_0 = arith.constant 0 : i32
    return %arg0, %c0_i32 : i32, i32
  }
  func.func @transform_2(%arg0: i32, %arg1: i32) -> (i32, i32) {
    %c0_i32 = arith.constant 0 : i32
    %c0_i32_0 = arith.constant 0 : i32
    return %arg0, %c0_i32 : i32, i32
  }
  func.func @transform_3(%arg0: i32, %arg1: i32) -> (i32, i32) {
    %c0_i32 = arith.constant 0 : i32
    %c0_i32_0 = arith.constant 0 : i32
    return %arg0, %c0_i32 : i32, i32
  }
  func.func @transform_4(%arg0: i32, %arg1: i32) -> (i32, i32) {
    %c0_i32 = arith.constant 0 : i32
    %c0_i32_0 = arith.constant 0 : i32
    return %arg0, %c0_i32 : i32, i32
  }
  func.func @transform_5(%arg0: i32, %arg1: i32) -> (i32, i32) {
    %c0_i32 = arith.constant 0 : i32
    %c0_i32_0 = arith.constant 0 : i32
    return %arg0, %c0_i32 : i32, i32
  }
  func.func @transform_6(%arg0: i32, %arg1: i32) -> (i32, i32) {
    %c0_i32 = arith.constant 0 : i32
    %c0_i32_0 = arith.constant 0 : i32
    return %arg0, %c0_i32 : i32, i32
  }
  func.func @transform_7(%arg0: i32, %arg1: i32) -> (i32, i32) {
    %c0_i32 = arith.constant 0 : i32
    %c0_i32_0 = arith.constant 0 : i32
    return %arg0, %c0_i32 : i32, i32
  }
  func.func @transform_8(%arg0: i32, %arg1: i32) -> (i32, i32) {
    %c0_i32 = arith.constant 0 : i32
    %c0_i32_0 = arith.constant 0 : i32
    return %c0_i32, %arg1 : i32, i32
  }
  func.func @transform_9(%arg0: i32, %arg1: i32) -> (i32, i32) {
    %c0_i32 = arith.constant 0 : i32
    %c0_i32_0 = arith.constant 0 : i32
    return %c0_i32, %arg1 : i32, i32
  }
  func.func @transform_10(%arg0: i32, %arg1: i32) -> (i32, i32) {
    %c0_i32 = arith.constant 0 : i32
    return %arg0, %arg1 : i32, i32
  }
}

</mosaic_0001>

<llo_original>
// kernel: delayed_mlp_forward.1
$region0: #{delayed_mlp_forward.1}
  #allocation0 [shape = 'u32[]', space=smem, size = 0x4, offset = 0x4, fixed_abs, tag = 'smem constant byte address 0x4 - core index']
  #allocation1 [shape = 'u32[144,128]{1,0:T(1,128)}', space=vmem, size = 0x12000, scoped, tag = 'internal scratch']
  #allocation2 [shape = 'f32[8,128]{1,0:T(8,128)}', space=vmem, size = 0x1000, scoped, tag = 'scratch operand']
  %s0 = inlined_call_operand.vmem [shape: f32[8,6], index: 0, kind: input, shape index: {}]
  %s1 = inlined_call_operand.vmem [shape: f32[8,3], index: 1, kind: input, shape index: {}]
  %s2 = inlined_call_operand.vmem [shape: f32[8,3], index: 2, kind: input, shape index: {}]
  %s3 = inlined_call_operand.vmem [shape: f32[8,3], index: 3, kind: input, shape index: {}]
  %s4 = inlined_call_operand.vmem [shape: f32[8,3], index: 4, kind: input, shape index: {}]
  %s5 = inlined_call_operand.vmem [shape: s32[8,1], index: 5, kind: input, shape index: {}]
  %s6 = inlined_call_operand.vmem [shape: s32[8,1], index: 6, kind: input, shape index: {}]
  %s7 = inlined_call_operand.vmem [shape: f32[8,3], index: 7, kind: input, shape index: {}]
  %s8 = inlined_call_operand.vmem [shape: f32[128,128], index: 8, kind: input, shape index: {}]
  %s9 = inlined_call_operand.vmem [shape: f32[1,128], index: 9, kind: input, shape index: {}]
  %s10 = inlined_call_operand.vmem [shape: f32[8,128], index: 10, kind: output, shape index: {}]
  %s11 = sld [smem:[#allocation0]]
  $region50: #{delayed_mlp_forward.1} parent=0
    _
  %s13 = ssub.s32 1, %s11
  %s14 = scalar_select 0, %s13, %s11
  // Predicated region
  $region2: #{delayed_mlp_forward.1} parent=0 // pred_check
    _
  $region3: #{delayed_mlp_forward.1} parent=0 // pred_check_branch
    %16 = sbr.rel (0) target = $region5
  $region4: #{delayed_mlp_forward.1} parent=0 // pred_region
    _
  $region5: #{delayed_mlp_forward.1} parent=0 // pred_fallthru
    _
  // Predicated region
  $region6: #{delayed_mlp_forward.1} parent=0 // pred_check
    _
  $region7: #{delayed_mlp_forward.1} parent=0 // pred_check_branch
    %18 = sbr.rel (0) target = $region9
  $region8: #{delayed_mlp_forward.1} parent=0 // pred_region
    _
  $region9: #{delayed_mlp_forward.1} parent=0 // pred_fallthru
    _
  // Predicated region
  $region10: #{delayed_mlp_forward.1} parent=0 // pred_check
    _
  $region11: #{delayed_mlp_forward.1} parent=0 // pred_check_branch
    %20 = sbr.rel (0) target = $region13
  $region12: #{delayed_mlp_forward.1} parent=0 // pred_region
    _
  $region13: #{delayed_mlp_forward.1} parent=0 // pred_fallthru
    _
  // Predicated region
  $region14: #{delayed_mlp_forward.1} parent=0 // pred_check
    _
  $region15: #{delayed_mlp_forward.1} parent=0 // pred_check_branch
    %22 = sbr.rel (0) target = $region17
  $region16: #{delayed_mlp_forward.1} parent=0 // pred_region
    _
  $region17: #{delayed_mlp_forward.1} parent=0 // pred_fallthru
    _
  // Predicated region
  $region18: #{delayed_mlp_forward.1} parent=0 // pred_check
    _
  $region19: #{delayed_mlp_forward.1} parent=0 // pred_check_branch
    %24 = sbr.rel (0) target = $region21
  $region20: #{delayed_mlp_forward.1} parent=0 // pred_region
    _
  $region21: #{delayed_mlp_forward.1} parent=0 // pred_fallthru
    _
  // Predicated region
  $region22: #{delayed_mlp_forward.1} parent=0 // pred_check
    _
  $region23: #{delayed_mlp_forward.1} parent=0 // pred_check_branch
    %26 = sbr.rel (0) target = $region25
  $region24: #{delayed_mlp_forward.1} parent=0 // pred_region
    _
  $region25: #{delayed_mlp_forward.1} parent=0 // pred_fallthru
    _
  // Predicated region
  $region26: #{delayed_mlp_forward.1} parent=0 // pred_check
    _
  $region27: #{delayed_mlp_forward.1} parent=0 // pred_check_branch
    %28 = sbr.rel (0) target = $region29
  $region28: #{delayed_mlp_forward.1} parent=0 // pred_region
    _
  $region29: #{delayed_mlp_forward.1} parent=0 // pred_fallthru
    _
  // Predicated region
  $region30: #{delayed_mlp_forward.1} parent=0 // pred_check
    _
  $region31: #{delayed_mlp_forward.1} parent=0 // pred_check_branch
    %30 = sbr.rel (0) target = $region33
  $region32: #{delayed_mlp_forward.1} parent=0 // pred_region
    _
  $region33: #{delayed_mlp_forward.1} parent=0 // pred_fallthru
    _
  // Predicated region
  $region34: #{delayed_mlp_forward.1} parent=0 // pred_check
    _
  $region35: #{delayed_mlp_forward.1} parent=0 // pred_check_branch
    %32 = sbr.rel (0) target = $region37
  $region36: #{delayed_mlp_forward.1} parent=0 // pred_region
    _
  $region37: #{delayed_mlp_forward.1} parent=0 // pred_fallthru
    _
  // Predicated region
  $region38: #{delayed_mlp_forward.1} parent=0 // pred_check
    _
  $region39: #{delayed_mlp_forward.1} parent=0 // pred_check_branch
    %34 = sbr.rel (0) target = $region41
  $region40: #{delayed_mlp_forward.1} parent=0 // pred_region
    _
  $region41: #{delayed_mlp_forward.1} parent=0 // pred_fallthru
    _
  %v35 = vld [vmem:[%s0] sm:$0xff]
  %vm36 = vcmask 48128
  %37 = vst.msk [vmem:[#allocation2] sm:$0xff] %vm36, %v35
  %v38 = vld [vmem:[%s1] sm:$0xff]
  %40 = vrot.lane.b32.xlu0 %v38, 6
  %v41 = vpop.permute.xlu0 %40
  %vm43 = vcmask 72752
  %44 = vst.msk [vmem:[#allocation2] sm:$0xff] %vm43, %v41
  %v45 = vld [vmem:[%s2] sm:$0xff]
  %47 = vrot.lane.b32.xlu0 %v45, 9
  %v48 = vpop.permute.xlu0 %47
  %vm50 = vcmask 97352
  %51 = vst.msk [vmem:[#allocation2] sm:$0xff] %vm50, %v48
  %v52 = vld [vmem:[%s3] sm:$0xff]
  %54 = vrot.lane.b32.xlu0 %v52, 12
  %v55 = vpop.permute.xlu0 %54
  %vm57 = vcmask 121952
  %58 = vst.msk [vmem:[#allocation2] sm:$0xff] %vm57, %v55
  %v59 = vld [vmem:[%s4] sm:$0xff]
  %61 = vrot.lane.b32.xlu0 %v59, 15
  %v62 = vpop.permute.xlu0 %61
  %vm64 = vcmask 146552
  %65 = vst.msk [vmem:[#allocation2] sm:$0xff] %vm64, %v62
  %v66 = vlaneseq
  %v67 = vand.u32 %v66, 127
  %v68 = vld [vmem:[%s5] sm:$0xff]
  %69 = vset.pattern.permute.xlu0 0
  %70 = vperm.xlu0 %69, %v68
  %v71 = vpop.permute.xlu0 %70
  %vm72 = vcmp.eq.s32.totalorder %v67, %v71
  %v73 = vsel %vm72, 1, 0
  %v74 = vcvt.s32.f32 %v73
  %76 = vrot.lane.b32.xlu0 %v74, 18
  %v77 = vpop.permute.xlu0 %76
  %vm79 = vcmask 179344
  %80 = vst.msk [vmem:[#allocation2] sm:$0xff] %vm79, %v77
  %v81 = vld [vmem:[%s6] sm:$0xff]
  %82 = vset.pattern.permute.xlu0 0
  %83 = vperm.xlu0 %82, %v81
  %v84 = vpop.permute.xlu0 %83
  %vm85 = vcmp.eq.s32.totalorder %v67, %v84
  %v86 = vsel %vm85, 1, 0
  %v87 = vcvt.s32.f32 %v86
  %89 = vrot.lane.b32.xlu0 %v87, 22
  %v90 = vpop.permute.xlu0 %89
  %vm92 = vcmask 212144
  %93 = vst.msk [vmem:[#allocation2] sm:$0xff] %vm92, %v90
  %v94 = vld [vmem:[%s7] sm:$0xff]
  %96 = vrot.lane.b32.xlu0 %v94, 26
  %v97 = vpop.permute.xlu0 %96
  %vm99 = vcmask 236752
  %100 = vst.msk [vmem:[#allocation2] sm:$0xff] %vm99, %v97
  %vm101 = vcmask 1047784
  %102 = vst.msk [vmem:[#allocation2] sm:$0xff] %vm101, 0.0
  %v103 = vld [vmem:[#allocation2] sm:$0xff]
  %v104 = vld [vmem:[%s8] sm:$0xff]
  %v105 = vld [vmem:[%s8 + $0x8] sm:$0xff]
  %v106 = vld [vmem:[%s8 + $0x10] sm:$0xff]
  %v107 = vld [vmem:[%s8 + $0x18] sm:$0xff]
  %v108 = vld [vmem:[%s8 + $0x20] sm:$0xff]
  %v109 = vld [vmem:[%s8 + $0x28] sm:$0xff]
  %v110 = vld [vmem:[%s8 + $0x30] sm:$0xff]
  %v111 = vld [vmem:[%s8 + $0x38] sm:$0xff]
  %v112 = vld [vmem:[%s8 + $0x40] sm:$0xff]
  %v113 = vld [vmem:[%s8 + $0x48] sm:$0xff]
  %v114 = vld [vmem:[%s8 + $0x50] sm:$0xff]
  %v115 = vld [vmem:[%s8 + $0x58] sm:$0xff]
  %v116 = vld [vmem:[%s8 + $0x60] sm:$0xff]
  %v117 = vld [vmem:[%s8 + $0x68] sm:$0xff]
  %v118 = vld [vmem:[%s8 + $0x70] sm:$0xff]
  %v119 = vld [vmem:[%s8 + $0x78] sm:$0xff]
  %v120 = vld [vmem:[%s9] sm:$0x1]
  %v122 = vlaneseq
  %v123 = vshrl.u32 %v122, 7
  %v124 = vsub.s32 0, %v123
  %v125 = vrot.slane %v120, %v124
  %127 = vmatprep.subr.mxu0 0.0
  %128 = vmatpush1.msra.mxu0 %v104
  %129 = vmatprep.subr.mxu0 0.0
  %130 = vmatpush1.msra.mxu0 %v105
  %131 = vmatprep.subr.mxu0 0.0
  %132 = vmatpush1.msra.mxu0 %v106
  %133 = vmatprep.subr.mxu0 0.0
  %134 = vmatpush1.msra.mxu0 %v107
  %135 = vmatprep.subr.mxu0 0.0
  %136 = vmatpush1.msra.mxu0 %v108
  %137 = vmatprep.subr.mxu0 0.0
  %138 = vmatpush1.msra.mxu0 %v109
  %139 = vmatprep.subr.mxu0 0.0
  %140 = vmatpush1.msra.mxu0 %v110
  %141 = vmatprep.subr.mxu0 0.0
  %142 = vmatpush1.msra.mxu0 %v111
  %143 = vmatprep.subr.mxu0 0.0
  %144 = vmatpush1.msra.mxu0 %v112
  %145 = vmatprep.subr.mxu0 0.0
  %146 = vmatpush1.msra.mxu0 %v113
  %147 = vmatprep.subr.mxu0 0.0
  %148 = vmatpush1.msra.mxu0 %v114
  %149 = vmatprep.subr.mxu0 0.0
  %150 = vmatpush1.msra.mxu0 %v115
  %151 = vmatprep.subr.mxu0 0.0
  %152 = vmatpush1.msra.mxu0 %v116
  %153 = vmatprep.subr.mxu0 0.0
  %154 = vmatpush1.msra.mxu0 %v117
  %155 = vmatprep.subr.mxu0 0.0
  %156 = vmatpush1.msra.mxu0 %v118
  %157 = vmatprep.subr.mxu0 0.0
  %158 = vmatpush1.msra.mxu0 %v119
  %159 = vmatprep.subr.mxu0 0.0
  %160 = vmatpush1.msra.mxu0 0.0
  %161 = vmatprep.subr.mxu0 0.0
  %162 = vmatpush1.msra.mxu0 0.0
  %163 = vmatprep.subr.mxu0 0.0
  %164 = vmatpush1.msra.mxu0 0.0
  %165 = vmatprep.subr.mxu0 0.0
  %166 = vmatpush1.msra.mxu0 0.0
  %167 = vmatprep.subr.mxu0 0.0
  %168 = vmatpush1.msra.mxu0 0.0
  %169 = vmatprep.subr.mxu0 0.0
  %170 = vmatpush1.msra.mxu0 0.0
  %171 = vmatprep.subr.mxu0 0.0
  %172 = vmatpush1.msra.mxu0 0.0
  %173 = vmatprep.subr.mxu0 0.0
  %174 = vmatpush1.msra.mxu0 0.0
  %175 = vmatprep.subr.mxu0 0.0
  %176 = vmatpush1.msra.mxu0 0.0
  %177 = vmatprep.subr.mxu0 0.0
  %178 = vmatpush1.msra.mxu0 0.0
  %179 = vmatprep.subr.mxu0 0.0
  %180 = vmatpush1.msra.mxu0 0.0
  %181 = vmatprep.subr.mxu0 0.0
  %182 = vmatpush1.msra.mxu0 0.0
  %183 = vmatprep.subr.mxu0 0.0
  %184 = vmatpush1.msra.mxu0 0.0
  %185 = vmatprep.subr.mxu0 0.0
  %186 = vmatpush1.msra.mxu0 0.0
  %187 = vmatprep.subr.mxu0 0.0
  %188 = vmatpush1.msra.mxu0 0.0
  %189 = vmatprep.subr.mxu0 0.0
  %190 = vmatpush1.msra.mxu0 0.0
  %191 = vmatprep.mubr.f32.mxu0 0.0
  %192 = vmatmul.mubr.f32.gmra.mrb[0].mxu0 %v103
  %v193 = vpop.f32.mrb[0].mxu0
  %v194 = vadd.f32 %v125, %v193
  %v195 = vpop.f32.mrb[0].mxu0
  %196 = vdwg.mxu0
  %197 = vst [vmem:[%s10] sm:$0xff] %v194
  // Predicated region
  $region42: #{delayed_mlp_forward.1} parent=0 // pred_check
    _
  $region43: #{delayed_mlp_forward.1} parent=0 // pred_check_branch
    %199 = sbr.rel (0) target = $region45
  $region44: #{delayed_mlp_forward.1} parent=0 // pred_region
    _
  $region45: #{delayed_mlp_forward.1} parent=0 // pred_fallthru
    _
  // Predicated region
  $region46: #{delayed_mlp_forward.1} parent=0 // pred_check
    _
  $region47: #{delayed_mlp_forward.1} parent=0 // pred_check_branch
    %201 = sbr.rel (0) target = $region49
  $region48: #{delayed_mlp_forward.1} parent=0 // pred_region
    _
  $region49: #{delayed_mlp_forward.1} parent=0 // pred_fallthru
    _

</llo_original>
